<compile_context>
chip_gen: v6e
topology: v6e:2x2x1
jax: 0.10.0
libtpu: 0.0.40
codegen_flags: <defaults>
</compile_context>

<pallas_src>
import functools

import numpy as np
import jax
import jax.numpy as jnp
from jax import lax
from jax.experimental import pallas as pl
from jax.experimental.pallas import tpu as pltpu

# ---- fixed hyperparameters (globals in the original file) -------------------
CONV_FACTOR = 4
KERNEL_SIZE = 3
PADDING = 1
STRIDE = 1
DILATION = 1
POOL_SIZE = 2
NUM_CLASSES = 4

SEQ_LEN = 512        # original 20000; small test size, keeps lanes 128-aligned
BATCH = 32


def _after_conv_pool(length):
    conv = np.floor((length + 2 * PADDING - DILATION * (KERNEL_SIZE - 1) - 1)
                    / STRIDE + 1)
    return int(np.floor(conv / POOL_SIZE))


CONV1_LEN = _after_conv_pool(SEQ_LEN)        # 256
CONV2_LEN = _after_conv_pool(CONV1_LEN)      # 128
FC_IN = CONV_FACTOR ** 2 * CONV2_LEN         # 2048

assert SEQ_LEN % (POOL_SIZE * POOL_SIZE) == 0
assert CONV2_LEN % 128 == 0, "keep the lane dims dense multiples of 128"
assert BATCH % 8 == 0


# ---------------------------------------------------------------------------
# One-time probe of pltpu.roll's rotation direction (so tap indexing is
# robust to the convention regardless of jax/jaxlib version).
# ---------------------------------------------------------------------------
_ROLL_PROBE_RESULT = None


def _roll_matches_numpy():
    """True iff pltpu.roll(x, 1)[..., i] == x[..., i-1] (numpy convention)."""
    global _ROLL_PROBE_RESULT
    if _ROLL_PROBE_RESULT is None:
        def probe(x_ref, o_ref):
            o_ref[...] = pltpu.roll(x_ref[...], 1, axis=1)

        x = lax.broadcasted_iota(jnp.float32, (8, 128), 1)
        y = pl.pallas_call(
            probe, out_shape=jax.ShapeDtypeStruct((8, 128), jnp.float32))(x)
        _ROLL_PROBE_RESULT = bool(float(y[0, 1]) == 0.0)
    return _ROLL_PROBE_RESULT


def _default_batch_tile(batch):
    """Whole-batch tile (grid=(1,)) on single-TC chips (v5e/v6e); two grid
    steps on v7x so the "parallel" batch axis can split across its 2 TCs."""
    try:
        kind = jax.devices()[0].device_kind.lower()
    except Exception:
        kind = ""
    if "7" in kind and batch % 16 == 0:
        return batch // 2
    return batch


# ---------------------------------------------------------------------------
# Kernel: one batch tile end-to-end (conv1 -> conv2 -> fc1 -> softmax)
# ---------------------------------------------------------------------------
def _network_kernel(x_ref, w1_ref, b1_ref, w2_ref, b2_ref, wf_ref, bf_ref,
                    out_ref, flat_ref, *, roll_matches_numpy):
    bt, L1 = x_ref.shape
    L2 = L1 // POOL_SIZE
    L3 = L2 // POOL_SIZE

    def shift_by(h, d):
        # out[..., l] = h[..., l + d] for d in {-1, +1}; edges handled by the
        # caller's hoisted masks.  pltpu.roll keeps the lane layout aligned
        # (no unaligned concatenate) and runs on the otherwise idle XLU slot.
        L = h.shape[-1]
        shift = (-d) % L if roll_matches_numpy else d % L
        return pltpu.roll(h, shift, axis=h.ndim - 1)

    def pool(a):
        # MaxPool1d(POOL_SIZE): non-overlapping pair max along the last axis.
        # Kept as reshape+max: stride-2 lane compaction has no reliable Mosaic
        # lowering; the relayout is tiny relative to the conv work.
        b, l = a.shape
        return a.reshape(b, l // POOL_SIZE, POOL_SIZE).max(axis=-1)

    x = x_ref[...]                                    # (Bt, L1) f32

    # Edge masks, hoisted: one iota per length, shared by every shifted tap.
    pos1 = lax.broadcasted_iota(jnp.int32, (bt, L1), 1)
    pos2 = lax.broadcasted_iota(jnp.int32, (bt, L2), 1)
    first1, last1 = pos1 == 0, pos1 == L1 - 1
    first2, last2 = pos2 == 0, pos2 == L2 - 1

    xm = jnp.where(first1, 0.0, shift_by(x, -1))      # x[l-1]  (zero pad)
    xp = jnp.where(last1, 0.0, shift_by(x, +1))       # x[l+1]  (zero pad)

    # ---- conv1 (Cin=1) -> pool -> (+bias) -> ReLU, per output channel ------
    # Scalar-broadcast FMAs on the VPU in sublane-dense (Bt, L) layout; bias
    # and ReLU after the pool (both commute with the window max) so they only
    # touch L/2 elements.
    h1 = []
    for c in range(CONV_FACTOR):
        taps = (w1_ref[c, 0] * xm + w1_ref[c, 1] * x + w1_ref[c, 2] * xp)
        h1.append(jnp.maximum(pool(taps) + b1_ref[c], 0.0))    # (Bt, L2)

    h1m = [jnp.where(first2, 0.0, shift_by(h, -1)) for h in h1]
    h1p = [jnp.where(last2, 0.0, shift_by(h, +1)) for h in h1]

    # ---- conv2: 16x4x3 scalar-broadcast FMAs on the VPU ---------------------
    # A K=4 (or 12) contraction would underfeed the MXU; pure-VPU FMAs in the
    # sublane-dense layout are the right home on every generation.  Each
    # pooled+ReLU'd channel slab is stored straight into the lane-dense
    # flatten scratch at its 128-aligned lane offset (PyTorch flatten(x, 1)
    # order: c*L + l), avoiding any sublane->lane relayout.
    for o in range(CONV_FACTOR ** 2):
        acc = None
        for c in range(CONV_FACTOR):
            t = (w2_ref[o, 3 * c + 0] * h1m[c]
                 + w2_ref[o, 3 * c + 1] * h1[c]
                 + w2_ref[o, 3 * c + 2] * h1p[c])
            acc = t if acc is None else acc + t
        h2_o = jnp.maximum(pool(acc) + b2_ref[o], 0.0)          # (Bt, L3)
        flat_ref[:, o * L3:(o + 1) * L3] = h2_o

    # ---- fc1 (single MXU matmul, pre-transposed weight) + exact softmax ----
    z = jnp.dot(flat_ref[...], wf_ref[...],
                preferred_element_type=jnp.float32) + bf_ref[...]   # (Bt, 4)
    z = z - jnp.max(z, axis=1, keepdims=True)
    e = jnp.exp(z)
    out_ref[...] = e / jnp.sum(e, axis=1, keepdims=True)


# ---------------------------------------------------------------------------
# Wrapper: batch-tiled grid, weights resident (SMEM scalars / VMEM fc weight)
# ---------------------------------------------------------------------------
def network_forward(x, params, *, batch_tile=None):
    w1, b1, w2, b2, wf, bf = params      # PyTorch layouts
    B, cin, L = x.shape
    assert cin == 1 and L == SEQ_LEN
    if batch_tile is None:
        batch_tile = _default_batch_tile(B)
    assert B % batch_tile == 0 and batch_tile % 8 == 0

    x2d = x.reshape(B, L)                              # squeeze Cin=1
    # Tiny conv weights/biases live in SMEM and are read as scalars.
    w1s = w1.reshape(CONV_FACTOR, KERNEL_SIZE)                       # (4, 3)
    w2s = w2.reshape(CONV_FACTOR ** 2, CONV_FACTOR * KERNEL_SIZE)    # (16, 12)
    # fc weight transposed ONCE outside the kernel (free XLA transpose of a
    # tiny array) so no per-grid-step transpose happens inside Mosaic.
    wft = jnp.transpose(wf, (1, 0))                    # (2048, 4)
    bfr = bf.reshape(1, NUM_CLASSES)                   # (1, 4)

    kernel = functools.partial(_network_kernel,
                               roll_matches_numpy=_roll_matches_numpy())
    smem = pl.BlockSpec(memory_space=pltpu.MemorySpace.SMEM)

    return pl.pallas_call(
        kernel,
        out_shape=jax.ShapeDtypeStruct((B, NUM_CLASSES), jnp.float32),
        grid=(B // batch_tile,),
        in_specs=[
            pl.BlockSpec((batch_tile, L), lambda i: (i, 0)),   # x tile (VMEM)
            smem, smem, smem, smem,                            # w1, b1, w2, b2
            pl.BlockSpec(wft.shape, lambda i: (0, 0)),         # fc weight, resident
            pl.BlockSpec(bfr.shape, lambda i: (0, 0)),         # fc bias, resident
        ],
        out_specs=pl.BlockSpec((batch_tile, NUM_CLASSES), lambda i: (i, 0)),
        scratch_shapes=[pltpu.VMEM((batch_tile, FC_IN), jnp.float32)],
        compiler_params=pltpu.CompilerParams(
            dimension_semantics=("parallel",),        # v7x: 2 TCs share the grid
            vmem_limit_bytes=32 * 1024 * 1024,        # far above actual need
        ),
    )(x2d, w1s, b1, w2s, b2, wft, bfr)


# ---------------------------------------------------------------------------
# Parameters (PyTorch default init & layouts)
# ---------------------------------------------------------------------------
def init_params(key):
    ks = jax.random.split(key, 6)

    def uniform(k, shape, fan_in):
        bound = 1.0 / np.sqrt(fan_in)
        return jax.random.uniform(k, shape, jnp.float32, -bound, bound)

    w1 = uniform(ks[0], (CONV_FACTOR, 1, KERNEL_SIZE), 1 * KERNEL_SIZE)
    b1 = uniform(ks[1], (CONV_FACTOR,), 1 * KERNEL_SIZE)
    w2 = uniform(ks[2], (CONV_FACTOR ** 2, CONV_FACTOR, KERNEL_SIZE),
                 CONV_FACTOR * KERNEL_SIZE)
    b2 = uniform(ks[3], (CONV_FACTOR ** 2,), CONV_FACTOR * KERNEL_SIZE)
    wf = uniform(ks[4], (NUM_CLASSES, FC_IN), FC_IN)
    bf = uniform(ks[5], (NUM_CLASSES,), FC_IN)
    return (w1, b1, w2, b2, wf, bf)


# ---------------------------------------------------------------------------
# Pure-JAX reference (silent correctness verification)
# ---------------------------------------------------------------------------
def reference_forward(x, params):
    w1, b1, w2, b2, wf, bf = params

    def conv_relu_pool(xin, w, b):
        y = lax.conv_general_dilated(
            xin, w, window_strides=(STRIDE,), padding=[(PADDING, PADDING)],
            rhs_dilation=(DILATION,), dimension_numbers=("NCH", "OIH", "NCH"),
            precision=lax.Precision.HIGHEST)
        y = y + b[None, :, None]
        y = jnp.maximum(y, 0.0)
        B, C, L = y.shape
        return y.reshape(B, C, L // POOL_SIZE, POOL_SIZE).max(axis=-1)

    h1 = conv_relu_pool(x, w1, b1)
    h2 = conv_relu_pool(h1, w2, b2)
    flat = h2.reshape(h2.shape[0], -1)
    z = jnp.dot(flat, wf.T, precision=lax.Precision.HIGHEST) + bf[None, :]
    return jax.nn.softmax(z, axis=1)


if __name__ == "__main__":
    key = jax.random.PRNGKey(0)
    kx, kp = jax.random.split(key)
    x = jax.random.normal(kx, (BATCH, 1, SEQ_LEN), jnp.float32)   # (B, C=1, L)
    params = init_params(kp)

    out = jax.block_until_ready(network_forward(x, params))
    assert out.shape == (BATCH, NUM_CLASSES)

    ref = jax.block_until_ready(reference_forward(x, params))
    # Tolerance covers MXU f32 accumulation-order differences vs the HIGHEST
    # precision reference; any structural bug is far larger.
    np.testing.assert_allclose(np.asarray(out), np.asarray(ref),
                               rtol=1e-3, atol=1e-3)

    print("KERNEL_OK")
</pallas_src>

<mosaic_0001>
module attributes {stable_mosaic.version = 11 : i64} {
  func.func @probe(%arg0: memref<8x128xf32, #tpu.memory_space<vmem>>, %arg1: memref<8x128xf32, #tpu.memory_space<vmem>>) attributes {dimension_semantics = [], scalar_prefetch = 0 : i64, scratch_operands = 0 : i64, tpu.core_type = #tpu.core_type<tc>} {
    %c0 = arith.constant 0 : index
    %c0_0 = arith.constant 0 : index
    %0 = vector.load %arg0[%c0, %c0_0] : memref<8x128xf32, #tpu.memory_space<vmem>>, vector<8x128xf32>
    %c1_i32 = arith.constant 1 : i32
    %1 = tpu.dynamic_rotate %0 by %c1_i32 dim 1 : vector<8x128xf32>, i32 -> vector<8x128xf32>
    %c0_1 = arith.constant 0 : index
    %c0_2 = arith.constant 0 : index
    %2 = vector.load %arg1[%c0_1, %c0_2] : memref<8x128xf32, #tpu.memory_space<vmem>>, vector<8x128xf32>
    tpu.vector_store %arg1[%c0_1, %c0_2], %1 {strides = array<i32>} : memref<8x128xf32, #tpu.memory_space<vmem>>, vector<8x128xf32>,
    return
  }
}

</mosaic_0001>

<llo_original>
// kernel: tpu_custom_call.1
$region0: #{tpu_custom_call.1}
  #allocation0 [shape = 'u32[]', space=smem, size = 0x4, offset = 0x4, fixed_abs, tag = 'smem constant byte address 0x4 - core index']
  #allocation1 [shape = 'u32[144,128]{1,0:T(1,128)}', space=vmem, size = 0x12000, scoped, tag = 'internal scratch']
  %s0 = inlined_call_operand.hbm [shape: f32[8,128], index: 0, kind: input, shape index: {}]
  %s1 = inlined_call_operand.hbm [shape: f32[8,128], index: 1, kind: output, shape index: {}]
  %s2 = sld [smem:[#allocation0]]
  $region18: #{tpu_custom_call.1} parent=0
    _
  %s4 = ssub.s32 1, %s2
  %s5 = scalar_select 0, %s4, %s2
  $region1: #{tpu_custom_call.1} parent=0
    #allocation2 [shape = 'u8[4096]{0}', space=vmem, size = 0x1000, scoped, tag = 'input window, operand 0, single buffered']
    #allocation3 [shape = 's32[1]{0}', space=sflag, size = 0x4, scoped, tag = 'scoped memory for tpu_custom_call.1']
    #allocation4 [shape = 's32[1]{0}', space=sflag, size = 0x4, scoped, tag = 'scoped memory for tpu_custom_call.1']
    #allocation5 [shape = 'u8[4096]{0}', space=vmem, size = 0x1000, scoped, tag = 'output window, operand 0, single buffered']
    %6 = vsyncpa [#allocation3], 0
    %7 = vsyncpa [#allocation4], 0
    // Predicated region
    $region2: #{tpu_custom_call.1} parent=1 // pred_check
      _
    $region3: #{tpu_custom_call.1} parent=1 // pred_check_branch
      %9 = sbr.rel (0) target = $region5
    $region4: #{tpu_custom_call.1} parent=1 // pred_region
      %s11 = ssub.s32 128, 128
      %12 = vsyncadd [#allocation3], %s11
      %s14 = sshll.u32 [#allocation2], 4
      %s15 = int_to_ptr.vmem [resolvable:$true] %s14
      %17 = dma.hbm_to_vmem [thread:$0]  %s0, 128, %s15, [#allocation3]
    $region5: #{tpu_custom_call.1} parent=1 // pred_fallthru
      _
    // Predicated region
    $region6: #{tpu_custom_call.1} parent=1 // pred_check
      _
    $region7: #{tpu_custom_call.1} parent=1 // pred_check_branch
      %19 = sbr.rel (0) target = $region9
    $region8: #{tpu_custom_call.1} parent=1 // pred_region
      %20 = dma.done [#allocation3], 128
    $region9: #{tpu_custom_call.1} parent=1 // pred_fallthru
      _
    %v21 = vld [vmem:[#allocation2] sm:$0xff]
    %22 = vrot.lane.b32.xlu0 %v21, 1
    %v23 = vpop.permute.xlu0 %22
    %24 = vst [vmem:[#allocation5] sm:$0xff] %v23
    // Predicated region
    $region10: #{tpu_custom_call.1} parent=1 // pred_check
      _
    $region11: #{tpu_custom_call.1} parent=1 // pred_check_branch
      %26 = sbr.rel (0) target = $region13
    $region12: #{tpu_custom_call.1} parent=1 // pred_region
      %s28 = ssub.s32 128, 128
      %29 = vsyncadd [#allocation4], %s28
      %s31 = sshll.u32 [#allocation5], 4
      %s32 = int_to_ptr.vmem [resolvable:$true] %s31
      %34 = dma.vmem_to_hbm [thread:$0]  %s32, 128, %s1, [#allocation4]
    $region13: #{tpu_custom_call.1} parent=1 // pred_fallthru
      _
    // Predicated region
    $region14: #{tpu_custom_call.1} parent=1 // pred_check
      _
    $region15: #{tpu_custom_call.1} parent=1 // pred_check_branch
      %36 = sbr.rel (0) target = $region17
    $region16: #{tpu_custom_call.1} parent=1 // pred_region
      %37 = dma.done [#allocation4], 128
    $region17: #{tpu_custom_call.1} parent=1 // pred_fallthru
      _
    %38 = vsyncpa [#allocation3], 1
    %39 = vsyncpa [#allocation4], 1

</llo_original>
